<compile_context>
chip_gen: v7x
topology: tpu7x:2x2x1
jax: 0.10.0
libtpu: 0.0.40
codegen_flags: <defaults>
</compile_context>

<pallas_src>
import functools

import jax
import jax.numpy as jnp
from jax.experimental import pallas as pl
from jax.experimental.pallas import tpu as pltpu


# ----------------------------------------------------------------------------
# Fast path: tiled kernel, grid = (n_x + n_s,), flat (B, (C+1)*hw) output
# ----------------------------------------------------------------------------
def _mbstd_tiled_kernel(x_ref, o_ref, acc_ref, *, n_x, inv_n_feat, alpha):
    i = pl.program_id(0)

    @pl.when(i == 0)
    def _init():
        acc_ref[...] = jnp.zeros_like(acc_ref)

    @pl.when(i < n_x)
    def _feature_step():
        x = x_ref[...]                                    # (B, TN), input dtype
        xf = x.astype(jnp.float32)                        # stats in f32
        mu = jnp.mean(xf, axis=0, keepdims=True)          # (1, TN)
        d = xf - mu
        var = jnp.mean(d * d, axis=0, keepdims=True)      # biased variance
        std = jnp.sqrt(var + alpha)                       # (1, TN)
        acc_ref[...] += std                               # pure VPU add, no XLU reduce
        o_ref[...] = x                                    # pass-through

    @pl.when(i >= n_x)
    def _std_step():
        # Single cross-lane reduction, done only on the (usually single) tail
        # step; out-of-bounds lanes of this partial output block are masked by
        # Pallas so only the hw std-channel columns land in HBM.
        s = jnp.sum(acc_ref[...], keepdims=True) * inv_n_feat     # (1, 1) f32
        o_ref[...] = jnp.broadcast_to(s, o_ref.shape).astype(o_ref.dtype)


def _choose_tn(n_feat, batch, itemsize):
    """Pick the lane-tile width TN for the fast path.

    TN must divide n_feat = C*H*W and be a multiple of 128.  Sized so each
    (B, TN) tile moves ~1 MiB of HBM traffic (amortizes the ~0.35 us/step grid
    overhead; mem-bound kernels reach ~85% of HBM roofline with 0.5-2 MiB
    tiles) while the pipelined VMEM footprint stays under ~20 MiB — safe for
    v5e's 16 MiB default scoped VMEM (we also raise vmem_limit_bytes to 32 MiB)
    and well under v7x's 64 MiB physical / 32 MiB scoped.  Returns None when
    n_feat is not 128-aligned (fallback path).
    """
    if n_feat % 128 != 0:
        return None
    # Sublane padding of VMEM tiles: (8,128) for 32-bit, (16,128) for 16-bit, ...
    sub = 8 * max(1, 4 // itemsize)
    pad_in = -(-batch // sub) * sub          # padded rows of in/out buffers
    pad32 = -(-batch // 8) * 8               # padded rows of f32 temps
    # Per-lane VMEM bytes: 2 in + 2 out pipeline buffers (input dtype)
    # + ~3 full-height f32 temps (centered values etc.) + the (1, TN) f32 acc.
    per_lane = 4 * pad_in * itemsize + 3 * pad32 * 4 + 4
    vmem_budget = 20 * 1024 * 1024
    tn_vmem = max(128, (vmem_budget // per_lane) // 128 * 128)
    # ~1 MiB of HBM bytes per input tile.
    tn_hbm = max(128, ((1 << 20) // (batch * itemsize)) // 128 * 128)
    cap = min(tn_vmem, tn_hbm)
    if n_feat <= cap:
        return n_feat
    for m in range(cap // 128, 0, -1):
        tn = 128 * m
        if n_feat % tn == 0:
            return tn
    return 128  # unreachable: 128 always divides n_feat here


def _mbstd_tiled(x, alpha, tn):
    B, C, H, W = x.shape
    hw = H * W
    n_feat = C * hw
    n_x = n_feat // tn              # feature (pass-through + accumulate) steps
    n_s = pl.cdiv(hw, tn)           # std-channel write steps (last one partial)
    n_steps = n_x + n_s

    x_flat = x.reshape(B, n_feat)
    kernel = functools.partial(
        _mbstd_tiled_kernel, n_x=n_x, inv_n_feat=1.0 / n_feat, alpha=alpha
    )

    out_flat = pl.pallas_call(
        kernel,
        out_shape=jax.ShapeDtypeStruct((B, n_feat + hw), x.dtype),
        grid_spec=pltpu.PrefetchScalarGridSpec(
            num_scalar_prefetch=0,
            grid=(n_steps,),
            # Clamp the input block index on std steps: same block as the last
            # feature step => no extra input DMA for the tail step(s).
            in_specs=[
                pl.BlockSpec((B, tn), lambda i: (0, jnp.minimum(i, n_x - 1)))
            ],
            out_specs=pl.BlockSpec((B, tn), lambda i: (0, i)),
            scratch_shapes=[pltpu.VMEM((1, tn), jnp.float32)],
        ),
        compiler_params=pltpu.CompilerParams(
            dimension_semantics=("arbitrary",),       # sequential reduction chain
            vmem_limit_bytes=32 * 1024 * 1024,
        ),
    )(x_flat)

    return out_flat.reshape(B, C + 1, H, W)


# ----------------------------------------------------------------------------
# Fallback (C*H*W not a multiple of 128): reduction-only kernel + XLA concat.
# ----------------------------------------------------------------------------
def _mbstd_reduce_kernel(x_ref, s_ref, *, alpha):
    xf = x_ref[...].astype(jnp.float32)                           # (B, n_feat)
    mu = jnp.mean(xf, axis=0, keepdims=True)
    d = xf - mu
    std = jnp.sqrt(jnp.mean(d * d, axis=0, keepdims=True) + alpha)  # (1, n_feat)
    s = jnp.mean(std)
    s_ref[...] = jnp.broadcast_to(s, s_ref.shape)


def _mbstd_fallback(x, alpha):
    # TODO(synk): rare path; single full-tensor block could exceed scoped VMEM
    # for very large non-128-aligned activations — tile + fuse if it matters.
    B, C, H, W = x.shape
    hw = H * W
    n_feat = C * hw
    x_flat = x.reshape(B, n_feat)

    std_map = pl.pallas_call(
        functools.partial(_mbstd_reduce_kernel, alpha=alpha),
        out_shape=jax.ShapeDtypeStruct((1, hw), jnp.float32),
        grid=(1,),
        in_specs=[pl.BlockSpec((B, n_feat), lambda i: (0, 0))],
        out_specs=pl.BlockSpec((1, hw), lambda i: (0, 0)),
        compiler_params=pltpu.CompilerParams(dimension_semantics=("arbitrary",)),
    )(x_flat)

    s = std_map.reshape(1, 1, H, W).astype(x.dtype)
    s = jnp.broadcast_to(s, (B, 1, H, W))
    return jnp.concatenate([x, s], axis=1)


# ----------------------------------------------------------------------------
# Public wrapper
# ----------------------------------------------------------------------------
def minibatch_stddev(x, alpha=1e-8):
    """x: (B, C, H, W) -> (B, C+1, H, W), matching MinibatchStdDev.forward."""
    B, C, H, W = x.shape
    tn = _choose_tn(C * H * W, B, x.dtype.itemsize)
    if tn is not None:
        return _mbstd_tiled(x, alpha, tn)
    return _mbstd_fallback(x, alpha)


def _reference(x, alpha=1e-8):
    """Pure-JAX reference mirroring the PyTorch forward."""
    B, C, H, W = x.shape
    y = x - jnp.mean(x, axis=0, keepdims=True)
    y = jnp.sqrt(jnp.mean(y ** 2.0, axis=0) + alpha)
    s = jnp.mean(y).reshape(1, 1, 1, 1)
    s = jnp.broadcast_to(s, (B, 1, H, W))
    return jnp.concatenate([x, s], axis=1)


if __name__ == "__main__":
    key = jax.random.PRNGKey(0)

    test_shapes = [
        (2, 4, 16, 16),   # fast path: n_feat=1024, single feature block + 1 partial std block
        (2, 3, 32, 32),   # fast path: n_feat=3072
        (2, 64, 8, 8),    # fast path: canonical 8x8 placement (hw=64, n_feat=4096)
        (3, 5, 12, 12),   # fallback: n_feat=720 not 128-aligned
    ]

    for (B, C, H, W) in test_shapes:
        key, sub = jax.random.split(key)
        x = jax.random.normal(sub, (B, C, H, W), dtype=jnp.float32)

        out = jax.block_until_ready(minibatch_stddev(x))
        ref = _reference(x)

        assert out.shape == (B, C + 1, H, W), (out.shape, (B, C + 1, H, W))
        assert jnp.allclose(out, ref, atol=1e-5, rtol=1e-5), \
            f"mismatch vs reference for shape {(B, C, H, W)}"

    # Exercise the multi-feature-step accumulation path with a forced small tile
    # (n_x=4 feature steps + 1 std step).
    key, sub = jax.random.split(key)
    x = jax.random.normal(sub, (2, 4, 16, 16), dtype=jnp.float32)
    out = jax.block_until_ready(_mbstd_tiled(x, 1e-8, 256))
    assert jnp.allclose(out, _reference(x), atol=1e-5, rtol=1e-5), \
        "mismatch vs reference for forced-tile multi-step path"

    print("KERNEL_OK")
</pallas_src>

<mosaic_0001>
module attributes {stable_mosaic.version = 11 : i64} {
  func.func @_mbstd_tiled_kernel(%arg0: i32, %arg1: memref<2x1024xf32, #tpu.memory_space<vmem>>, %arg2: memref<2x1024xf32, #tpu.memory_space<vmem>>, %arg3: memref<1x1024xf32, #tpu.memory_space<vmem>>) attributes {dimension_semantics = [#tpu.dimension_semantics<arbitrary>], iteration_bounds = array<i64: 2>, scalar_prefetch = 0 : i64, scratch_operands = 1 : i64, tpu.core_type = #tpu.core_type<tc>, window_params = [{transform_indices = @transform_0, window_bounds = array<i64: 2, 1024>}, {transform_indices = @transform_1, window_bounds = array<i64: 2, 1024>}]} {
    %c0_i32 = arith.constant 0 : i32
    %0 = arith.cmpi eq, %arg0, %c0_i32 : i32
    %1 = arith.extui %0 : i1 to i32
    %c0_i32_0 = arith.constant 0 : i32
    %2 = arith.cmpi ne, %1, %c0_i32_0 : i32
    scf.if %2 {
      %cst = arith.constant 0.000000e+00 : f32
      %9 = vector.broadcast %cst : f32 to vector<1x1024xf32>
      %c0 = arith.constant 0 : index
      %c0_4 = arith.constant 0 : index
      %10 = vector.load %arg3[%c0, %c0_4] : memref<1x1024xf32, #tpu.memory_space<vmem>>, vector<1x1024xf32>
      tpu.vector_store %arg3[%c0, %c0_4], %9 {strides = array<i32>} : memref<1x1024xf32, #tpu.memory_space<vmem>>, vector<1x1024xf32>,
    } else {
    }
    %c1_i32 = arith.constant 1 : i32
    %3 = arith.cmpi slt, %arg0, %c1_i32 : i32
    %4 = arith.extui %3 : i1 to i32
    %c0_i32_1 = arith.constant 0 : i32
    %5 = arith.cmpi ne, %4, %c0_i32_1 : i32
    scf.if %5 {
      %c0 = arith.constant 0 : index
      %c0_4 = arith.constant 0 : index
      %9 = vector.load %arg1[%c0, %c0_4] : memref<2x1024xf32, #tpu.memory_space<vmem>>, vector<2x1024xf32>
      %cst = arith.constant dense<0.000000e+00> : vector<1024xf32>
      %10 = vector.multi_reduction <add>, %9, %cst [0] : vector<2x1024xf32> to vector<1024xf32>
      %11 = vector.shape_cast %10 : vector<1024xf32> to vector<1x1024xf32>
      %cst_5 = arith.constant 2.000000e+00 : f32
      %12 = vector.broadcast %cst_5 : f32 to vector<1x1024xf32>
      %13 = arith.divf %11, %12 : vector<1x1024xf32>
      %14 = vector.broadcast %13 : vector<1x1024xf32> to vector<2x1024xf32>
      %15 = arith.subf %9, %14 : vector<2x1024xf32>
      %16 = arith.mulf %15, %15 : vector<2x1024xf32>
      %cst_6 = arith.constant dense<0.000000e+00> : vector<1024xf32>
      %17 = vector.multi_reduction <add>, %16, %cst_6 [0] : vector<2x1024xf32> to vector<1024xf32>
      %18 = vector.shape_cast %17 : vector<1024xf32> to vector<1x1024xf32>
      %cst_7 = arith.constant 2.000000e+00 : f32
      %19 = vector.broadcast %cst_7 : f32 to vector<1x1024xf32>
      %20 = arith.divf %18, %19 : vector<1x1024xf32>
      %cst_8 = arith.constant 9.99999993E-9 : f32
      %21 = vector.broadcast %cst_8 : f32 to vector<1x1024xf32>
      %22 = arith.addf %20, %21 : vector<1x1024xf32>
      %23 = math.sqrt %22 : vector<1x1024xf32>
      %c0_9 = arith.constant 0 : index
      %c0_10 = arith.constant 0 : index
      %24 = vector.load %arg3[%c0_9, %c0_10] : memref<1x1024xf32, #tpu.memory_space<vmem>>, vector<1x1024xf32>
      %25 = arith.addf %24, %23 : vector<1x1024xf32>
      %c0_11 = arith.constant 0 : index
      %c0_12 = arith.constant 0 : index
      %26 = vector.load %arg3[%c0_11, %c0_12] : memref<1x1024xf32, #tpu.memory_space<vmem>>, vector<1x1024xf32>
      tpu.vector_store %arg3[%c0_11, %c0_12], %25 {strides = array<i32>} : memref<1x1024xf32, #tpu.memory_space<vmem>>, vector<1x1024xf32>,
      %c0_13 = arith.constant 0 : index
      %c0_14 = arith.constant 0 : index
      %27 = vector.load %arg2[%c0_13, %c0_14] : memref<2x1024xf32, #tpu.memory_space<vmem>>, vector<2x1024xf32>
      tpu.vector_store %arg2[%c0_13, %c0_14], %9 {strides = array<i32>} : memref<2x1024xf32, #tpu.memory_space<vmem>>, vector<2x1024xf32>,
    } else {
    }
    %c1_i32_2 = arith.constant 1 : i32
    %6 = arith.cmpi sge, %arg0, %c1_i32_2 : i32
    %7 = arith.extui %6 : i1 to i32
    %c0_i32_3 = arith.constant 0 : i32
    %8 = arith.cmpi ne, %7, %c0_i32_3 : i32
    scf.if %8 {
      %c0 = arith.constant 0 : index
      %c0_4 = arith.constant 0 : index
      %9 = vector.load %arg3[%c0, %c0_4] : memref<1x1024xf32, #tpu.memory_space<vmem>>, vector<1x1024xf32>
      %10 = vector.shape_cast %9 : vector<1x1024xf32> to vector<1x1x1024xf32>
      %cst = arith.constant dense<0.000000e+00> : vector<1xf32>
      %11 = vector.multi_reduction <add>, %10, %cst [1, 2] : vector<1x1x1024xf32> to vector<1xf32>
      %12 = vector.shape_cast %11 : vector<1xf32> to vector<1x1x1xf32>
      %13 = vector.extract %12[0, 0, 0] : f32 from vector<1x1x1xf32>
      %14 = vector.broadcast %13 : f32 to vector<1x1xf32>
      %cst_5 = arith.constant 9.765625E-4 : f32
      %15 = vector.broadcast %cst_5 : f32 to vector<1x1xf32>
      %16 = arith.mulf %14, %15 : vector<1x1xf32>
      %17 = vector.shape_cast %16 : vector<1x1xf32> to vector<1x1xf32>
      %18 = vector.broadcast %17 : vector<1x1xf32> to vector<2x1024xf32>
      %c0_6 = arith.constant 0 : index
      %c0_7 = arith.constant 0 : index
      %19 = vector.load %arg2[%c0_6, %c0_7] : memref<2x1024xf32, #tpu.memory_space<vmem>>, vector<2x1024xf32>
      tpu.vector_store %arg2[%c0_6, %c0_7], %18 {strides = array<i32>} : memref<2x1024xf32, #tpu.memory_space<vmem>>, vector<2x1024xf32>,
    } else {
    }
    return
  }
  func.func @transform_0(%arg0: i32) -> (i32, i32) {
    %c0_i32 = arith.constant 0 : i32
    %0 = arith.minsi %arg0, %c0_i32 : i32
    %c0_i32_0 = arith.constant 0 : i32
    %c0_i32_1 = arith.constant 0 : i32
    return %c0_i32_0, %0 : i32, i32
  }
  func.func @transform_1(%arg0: i32) -> (i32, i32) {
    %c0_i32 = arith.constant 0 : i32
    %c0_i32_0 = arith.constant 0 : i32
    return %c0_i32, %arg0 : i32, i32
  }
}

</mosaic_0001>

<llo_original>
// kernel: tpu_custom_call.1
$region0: #{tpu_custom_call.1}
  #allocation0 [shape = 'u32[]', space=smem, size = 0x4, offset = 0x4, fixed_abs, tag = 'smem constant byte address 0x4 - core index']
  #allocation1 [shape = 'u32[144,128]{1,0:T(1,128)}', space=vmem, size = 0x12000, scoped, tag = 'internal scratch']
  #allocation2 [shape = 'f32[1,1024]{1,0:T(1,128)}', space=vmem, size = 0x1000, scoped, tag = 'scratch operand']
  %s0 = inlined_call_operand.hbm [shape: f32[2,1024], index: 0, kind: input, shape index: {}]
  %s1 = inlined_call_operand.hbm [shape: f32[2,1280], index: 1, kind: output, shape index: {}]
  %s2 = sld [smem:[#allocation0]]
  $region53: #{tpu_custom_call.1} parent=0
    _
  %s4 = ssub.s32 1, %s2
  %s5 = scalar_select 0, %s4, %s2
  $region1: #{tpu_custom_call.1} parent=0
    #allocation3 [shape = 'u8[16384]{0}', space=vmem, size = 0x4000, scoped, tag = 'input window, operand 0']
    #allocation4 [shape = 's32[2]{0}', space=sflag, size = 0x8, scoped, tag = 'scoped memory for tpu_custom_call.1']
    #allocation5 [shape = 's32[2]{0}', space=sflag, size = 0x8, scoped, tag = 'scoped memory for tpu_custom_call.1']
    #allocation6 [shape = 'u8[16384]{0}', space=vmem, size = 0x4000, scoped, tag = 'output window, operand 0']
    %6 = vsyncpa [#allocation4], 0
    %s7 = scalar_lea.sflag [#allocation4], 1
    %8 = vsyncpa %s7, 0
    %9 = vsyncpa [#allocation5], 0
    %s10 = scalar_lea.sflag [#allocation5], 1
    %11 = vsyncpa %s10, 0
    loop: start=0, step=1, limit=4
    $region2: #{tpu_custom_call.1} parent=1 // loop_pre_header
      _
    $region3: #{tpu_custom_call.1} parent=1 // loop_header
      %s13 = sphi 0, %s17
      %p14 = scmp.ge.s32.totalorder %s13, 4
      %s27 = sphi 0, %s29
      %s30 = sphi 0, %s27
      %s31 = sphi 0, %s30
      %s47 = sphi 0, %s31
      %s53 = sphi 0, %s55
      %s56 = sphi 0, %s53
      %s57 = sphi 0, %s56
      %s73 = sphi 0, %s57
    $region4: #{tpu_custom_call.1} parent=1 // loop_header_branch
      %16 = sbr.rel (%p14) target = $region8
    $region5: #{tpu_custom_call.1} parent=1 // loop_body
      %s18 = ssub.s32 %s13, 1
      %s19 = ssub.s32 %s13, 2
      %s20 = sadd.s32 %s13, 1
      %p21 = scmp.lt.s32.totalorder %s13, 0
      %s22 = scalar_select %p21, %s13, 0
      %p23 = scmp.lt.s32.totalorder %s20, 0
      %s24 = scalar_select %p23, %s20, 0
      %s25 = ssub.s32 %s22, %s24
      %p26 = scmp.eq.s32.totalorder %s25, 0
      %s28 = sadd.s32 %s27, 1
      %s29 = scalar_select %p26, %s27, %s28
      %p32 = pneg %p26
      %p33 = scmp.eq.s32.totalorder %s13, 1
      %p34 = por %p32, %p33
      %p35 = scmp.ne.s32.totalorder %s27, %s30
      %p36 = scmp.eq.s32.totalorder %s13, 0
      %p37 = por %p35, %p36
      %p38 = scmp.ne.s32.totalorder %s27, %s30
      %p39 = scmp.eq.s32.totalorder %s18, 1
      %p40 = por %p38, %p39
      %p41 = scmp.ne.s32.totalorder %s30, %s31
      %p42 = scmp.eq.s32.totalorder %s18, 0
      %p43 = por %p41, %p42
      %p44 = scmp.ne.s32.totalorder %s30, %s31
      %p45 = scmp.eq.s32.totalorder %s19, 1
      %p46 = por %p44, %p45
      %p48 = scmp.ne.s32.totalorder %s31, %s47
      %p49 = scmp.eq.s32.totalorder %s19, 0
      %p50 = por %p48, %p49
      %s51 = ssub.s32 %s13, %s20
      %p52 = scmp.eq.s32.totalorder %s51, 0
      %s54 = sadd.s32 %s53, 1
      %s55 = scalar_select %p52, %s53, %s54
      %p58 = pneg %p52
      %p59 = scmp.eq.s32.totalorder %s13, 1
      %p60 = por %p58, %p59
      %p61 = scmp.ne.s32.totalorder %s53, %s56
      %p62 = scmp.eq.s32.totalorder %s13, 0
      %p63 = por %p61, %p62
      %p64 = scmp.ne.s32.totalorder %s53, %s56
      %p65 = scmp.eq.s32.totalorder %s18, 1
      %p66 = por %p64, %p65
      %p67 = scmp.ne.s32.totalorder %s56, %s57
      %p68 = scmp.eq.s32.totalorder %s18, 0
      %p69 = por %p67, %p68
      %p70 = scmp.ne.s32.totalorder %s56, %s57
      %p71 = scmp.eq.s32.totalorder %s19, 1
      %p72 = por %p70, %p71
      %p74 = scmp.ne.s32.totalorder %s57, %s73
      %p75 = scmp.eq.s32.totalorder %s19, 0
      %p76 = por %p74, %p75
      %p77 = scmp.le.s32.totalorder 1, %s13
      %p78 = scmp.lt.s32.totalorder %s13, 3
      %p79 = pnand %p77, %p78
      %p80 = pneg %p79
      // Predicated region
      $region9: #{tpu_custom_call.1} parent=5 // pred_check
        _
      $region10: #{tpu_custom_call.1} parent=5 // pred_check_branch
        %82 = sbr.rel (%p79) target = $region12
      $region11: #{tpu_custom_call.1} parent=5 // pred_region
        %s83 = ssub.s32 %s13, 1
      $region12: #{tpu_custom_call.1} parent=5 // pred_fallthru
        _
      %p84 = scmp.lt.s32.totalorder %s13, 2
      // Predicated region
      $region13: #{tpu_custom_call.1} parent=5 // pred_check
        %p85 = pneg %p84
      $region14: #{tpu_custom_call.1} parent=5 // pred_check_branch
        %87 = sbr.rel (%p85) target = $region16
      $region15: #{tpu_custom_call.1} parent=5 // pred_region
        // Predicated region
        $region17: #{tpu_custom_call.1} parent=15 // pred_check
          %p88 = pneg %p37
        $region18: #{tpu_custom_call.1} parent=15 // pred_check_branch
          %90 = sbr.rel (%p88) target = $region20
        $region19: #{tpu_custom_call.1} parent=15 // pred_region
          %s91 = sand.u32 %s27, 1
          %s92 = scalar_lea.sflag [#allocation4], %s91
          %s93 = sand.u32 %s27, 1
          %s94 = smul.addr %s93, 16
          %s95 = scalar_lea.vmem [#allocation3], %s94
          %p96 = scmp.lt.s32.totalorder %s13, 0
          %s97 = scalar_select %p96, %s13, 0
          %s98 = smul.u32 8, %s97
          %s100 = ssub.s32 256, 256
          %101 = vsyncadd %s92, %s100
          %s102 = smul.addr %s98, 32
          %s103 = scalar_lea.hbm %s0, %s102
          %s105 = sshll.u32 %s95, 4
          %s106 = int_to_ptr.vmem [resolvable:$true] %s105
          %108 = dma.hbm_to_vmem [thread:$0]  %s103, 256, %s106, %s92
        $region20: #{tpu_custom_call.1} parent=15 // pred_fallthru
          _
      $region16: #{tpu_custom_call.1} parent=5 // pred_fallthru
        _
      %p109 = scmp.le.s32.totalorder 1, %s13
      %p110 = scmp.lt.s32.totalorder %s13, 3
      %p111 = pnand %p109, %p110
      %p112 = pneg %p111
      // Predicated region
      $region21: #{tpu_custom_call.1} parent=5 // pred_check
        _
      $region22: #{tpu_custom_call.1} parent=5 // pred_check_branch
        %114 = sbr.rel (%p111) target = $region24
      $region23: #{tpu_custom_call.1} parent=5 // pred_region
        %s115 = ssub.s32 %s13, 1
        %s116 = sand.u32 %s30, 1
        %s117 = scalar_lea.sflag [#allocation4], %s116
        %s118 = sand.u32 %s30, 1
        %s119 = smul.addr %s118, 16
        %s120 = scalar_lea.vmem [#allocation3], %s119
        // Predicated region
        $region25: #{tpu_custom_call.1} parent=23 // pred_check
          %p121 = pneg %p43
        $region26: #{tpu_custom_call.1} parent=23 // pred_check_branch
          %123 = sbr.rel (%p121) target = $region28
        $region27: #{tpu_custom_call.1} parent=23 // pred_region
          %124 = dma.done %s117, 256
        $region28: #{tpu_custom_call.1} parent=23 // pred_fallthru
          _
        %s125 = sand.u32 %s30, 1
        %s126 = scalar_lea.sflag [#allocation4], %s125
        %s127 = sand.u32 %s30, 1
        %s128 = smul.addr %s127, 16
        %s129 = scalar_lea.vmem [#allocation3], %s128
        %p130 = pneg %p43
        %p131 = pneg %p40
        %p132 = pneg %p69
        %p133 = pneg %p66
        %s134 = sand.u32 %s56, 1
        %s135 = scalar_lea.sflag [#allocation5], %s134
        %s136 = sand.u32 %s56, 1
        %s137 = smul.addr %s136, 16
        %s138 = scalar_lea.vmem [#allocation6], %s137
        %p139 = scmp.lt.s32.totalorder %s18, 0
        %s140 = scalar_select %p139, %s18, 0
        %s141 = smul.u32 8, %s140
        %s142 = smul.u32 8, %s18
        %s143 = ssub.s32 10, %s142
        %p144 = scmp.lt.s32.totalorder %s143, 8
        %s145 = scalar_select %p144, %s143, 8
        %s146 = smul.u32 32, %s145
        %p147 = scmp.eq.s32.totalorder %s18, 0
        // Predicated region
        $region29: #{tpu_custom_call.1} parent=23 // pred_check
          %p148 = pneg %p147
        $region30: #{tpu_custom_call.1} parent=23 // pred_check_branch
          %150 = sbr.rel (%p148) target = $region32
        $region31: #{tpu_custom_call.1} parent=23 // pred_region
          %151 = vst [vmem:[#allocation2] sm:$0xff] 0.0
        $region32: #{tpu_custom_call.1} parent=23 // pred_fallthru
          _
        %p152 = scmp.lt.s32.totalorder %s18, 1
        // Predicated region
        $region33: #{tpu_custom_call.1} parent=23 // pred_check
          %p153 = pneg %p152
        $region34: #{tpu_custom_call.1} parent=23 // pred_check_branch
          %155 = sbr.rel (%p153) target = $region36
        $region35: #{tpu_custom_call.1} parent=23 // pred_region
          %v156 = vld [vmem:[%s120] sm:$0xff]
          %v157 = vld [vmem:[%s120 + $0x8] sm:$0xff]
          %v160 = vcombine.high %v156, %v156
          %v162 = vunpack.c.l.s4 1983009808
          %v163 = vunpack.c.0.s8 %v162
          %v164 = vlaneseq
          %v165 = vshrl.u32 %v164, 7
          %v166 = vsub.s32 %v163, %v165
          %v167 = vrot.slane %v156, %v166
          %v169 = vunpack.c.l.s4 1983009808
          %v170 = vunpack.c.0.s8 %v169
          %v171 = vlaneseq
          %v172 = vshrl.u32 %v171, 7
          %v173 = vsub.s32 %v170, %v172
          %v174 = vrot.slane %v160, %v173
          %v175 = vcombine.high %v167, %v167
          %v176 = vcombine.high %v174, %v174
          %v177 = vcombine.high %v157, %v157
          %v179 = vunpack.c.l.s4 1983009808
          %v180 = vunpack.c.0.s8 %v179
          %v181 = vlaneseq
          %v182 = vshrl.u32 %v181, 7
          %v183 = vsub.s32 %v180, %v182
          %v184 = vrot.slane %v157, %v183
          %v186 = vunpack.c.l.s4 1983009808
          %v187 = vunpack.c.0.s8 %v186
          %v188 = vlaneseq
          %v189 = vshrl.u32 %v188, 7
          %v190 = vsub.s32 %v187, %v189
          %v191 = vrot.slane %v177, %v190
          %v192 = vcombine.high %v184, %v184
          %v193 = vcombine.high %v191, %v191
          %vm202 = vcmask 1041408
          %v203 = vsel %vm202, %v167, 0.0
          %v204 = vrot.slane %v203, 4
          %v205 = vadd.f32 %v203, %v204
          %v206 = vrot.slane %v205, 2
          %v207 = vadd.f32 %v205, %v206
          %v208 = vrot.slane %v207, 1
          %v209 = vadd.f32 %v207, %v208
          %v210 = vsel %vm202, %v175, 0.0
          %v211 = vrot.slane %v210, 4
          %v212 = vadd.f32 %v210, %v211
          %v213 = vrot.slane %v212, 2
          %v214 = vadd.f32 %v212, %v213
          %v215 = vrot.slane %v214, 1
          %v216 = vadd.f32 %v214, %v215
          %v217 = vsel %vm202, %v174, 0.0
          %v218 = vrot.slane %v217, 4
          %v219 = vadd.f32 %v217, %v218
          %v220 = vrot.slane %v219, 2
          %v221 = vadd.f32 %v219, %v220
          %v222 = vrot.slane %v221, 1
          %v223 = vadd.f32 %v221, %v222
          %v224 = vsel %vm202, %v176, 0.0
          %v225 = vrot.slane %v224, 4
          %v226 = vadd.f32 %v224, %v225
          %v227 = vrot.slane %v226, 2
          %v228 = vadd.f32 %v226, %v227
          %v229 = vrot.slane %v228, 1
          %v230 = vadd.f32 %v228, %v229
          %v231 = vsel %vm202, %v184, 0.0
          %v232 = vrot.slane %v231, 4
          %v233 = vadd.f32 %v231, %v232
          %v234 = vrot.slane %v233, 2
          %v235 = vadd.f32 %v233, %v234
          %v236 = vrot.slane %v235, 1
          %v237 = vadd.f32 %v235, %v236
          %v238 = vsel %vm202, %v192, 0.0
          %v239 = vrot.slane %v238, 4
          %v240 = vadd.f32 %v238, %v239
          %v241 = vrot.slane %v240, 2
          %v242 = vadd.f32 %v240, %v241
          %v243 = vrot.slane %v242, 1
          %v244 = vadd.f32 %v242, %v243
          %v245 = vsel %vm202, %v191, 0.0
          %v246 = vrot.slane %v245, 4
          %v247 = vadd.f32 %v245, %v246
          %v248 = vrot.slane %v247, 2
          %v249 = vadd.f32 %v247, %v248
          %v250 = vrot.slane %v249, 1
          %v251 = vadd.f32 %v249, %v250
          %v252 = vsel %vm202, %v193, 0.0
          %v253 = vrot.slane %v252, 4
          %v254 = vadd.f32 %v252, %v253
          %v255 = vrot.slane %v254, 2
          %v256 = vadd.f32 %v254, %v255
          %v257 = vrot.slane %v256, 1
          %v258 = vadd.f32 %v256, %v257
          %v259 = vrcp.pop 2.0
          %v260 = vmul.f32 %v209, %v259
          %v261 = vmul.f32 %v216, %v259
          %v262 = vmul.f32 %v223, %v259
          %v263 = vmul.f32 %v230, %v259
          %v264 = vmul.f32 %v237, %v259
          %v265 = vmul.f32 %v244, %v259
          %v266 = vmul.f32 %v251, %v259
          %v267 = vmul.f32 %v258, %v259
          %v276 = vcombine.low %v260, %v261
          %v277 = vcombine.low %v262, %v263
          %v279 = vunpack.c.l.s4 1983009808
          %v280 = vunpack.c.0.s8 %v279
          %v281 = vlaneseq
          %v282 = vshrl.u32 %v281, 7
          %v283 = vsub.s32 %v280, %v282
          %v284 = vrot.slane %v276, %v283
          %v286 = vunpack.c.l.s4 1983009808
          %v287 = vunpack.c.0.s8 %v286
          %v288 = vlaneseq
          %v289 = vshrl.u32 %v288, 7
          %v290 = vsub.s32 %v287, %v289
          %v291 = vrot.slane %v277, %v290
          %v292 = vcombine.low %v284, %v291
          %v293 = vcombine.low %v264, %v265
          %v294 = vcombine.low %v266, %v267
          %v296 = vunpack.c.l.s4 1983009808
          %v297 = vunpack.c.0.s8 %v296
          %v298 = vlaneseq
          %v299 = vshrl.u32 %v298, 7
          %v300 = vsub.s32 %v297, %v299
          %v301 = vrot.slane %v293, %v300
          %v303 = vunpack.c.l.s4 1983009808
          %v304 = vunpack.c.0.s8 %v303
          %v305 = vlaneseq
          %v306 = vshrl.u32 %v305, 7
          %v307 = vsub.s32 %v304, %v306
          %v308 = vrot.slane %v294, %v307
          %v309 = vcombine.low %v301, %v308
          %v312 = vsub.f32 %v156, %v292
          %v313 = vsub.f32 %v157, %v309
          %v314 = vmul.f32 %v312, %v312
          %v315 = vmul.f32 %v313, %v313
          %v318 = vcombine.high %v314, %v314
          %v320 = vunpack.c.l.s4 1983009808
          %v321 = vunpack.c.0.s8 %v320
          %v322 = vlaneseq
          %v323 = vshrl.u32 %v322, 7
          %v324 = vsub.s32 %v321, %v323
          %v325 = vrot.slane %v314, %v324
          %v327 = vunpack.c.l.s4 1983009808
          %v328 = vunpack.c.0.s8 %v327
          %v329 = vlaneseq
          %v330 = vshrl.u32 %v329, 7
          %v331 = vsub.s32 %v328, %v330
          %v332 = vrot.slane %v318, %v331
          %v333 = vcombine.high %v325, %v325
          %v334 = vcombine.high %v332, %v332
          %v335 = vcombine.high %v315, %v315
          %v337 = vunpack.c.l.s4 1983009808
          %v338 = vunpack.c.0.s8 %v337
          %v339 = vlaneseq
          %v340 = vshrl.u32 %v339, 7
          %v341 = vsub.s32 %v338, %v340
          %v342 = vrot.slane %v315, %v341
          %v344 = vunpack.c.l.s4 1983009808
          %v345 = vunpack.c.0.s8 %v344
          %v346 = vlaneseq
          %v347 = vshrl.u32 %v346, 7
          %v348 = vsub.s32 %v345, %v347
          %v349 = vrot.slane %v335, %v348
          %v350 = vcombine.high %v342, %v342
          %v351 = vcombine.high %v349, %v349
          %v360 = vsel %vm202, %v325, 0.0
          %v361 = vrot.slane %v360, 4
          %v362 = vadd.f32 %v360, %v361
          %v363 = vrot.slane %v362, 2
          %v364 = vadd.f32 %v362, %v363
          %v365 = vrot.slane %v364, 1
          %v366 = vadd.f32 %v364, %v365
          %v367 = vsel %vm202, %v333, 0.0
          %v368 = vrot.slane %v367, 4
          %v369 = vadd.f32 %v367, %v368
          %v370 = vrot.slane %v369, 2
          %v371 = vadd.f32 %v369, %v370
          %v372 = vrot.slane %v371, 1
          %v373 = vadd.f32 %v371, %v372
          %v374 = vsel %vm202, %v332, 0.0
          %v375 = vrot.slane %v374, 4
          %v376 = vadd.f32 %v374, %v375
          %v377 = vrot.slane %v376, 2
          %v378 = vadd.f32 %v376, %v377
          %v379 = vrot.slane %v378, 1
          %v380 = vadd.f32 %v378, %v379
          %v381 = vsel %vm202, %v334, 0.0
          %v382 = vrot.slane %v381, 4
          %v383 = vadd.f32 %v381, %v382
          %v384 = vrot.slane %v383, 2
          %v385 = vadd.f32 %v383, %v384
          %v386 = vrot.slane %v385, 1
          %v387 = vadd.f32 %v385, %v386
          %v388 = vsel %vm202, %v342, 0.0
          %v389 = vrot.slane %v388, 4
          %v390 = vadd.f32 %v388, %v389
          %v391 = vrot.slane %v390, 2
          %v392 = vadd.f32 %v390, %v391
          %v393 = vrot.slane %v392, 1
          %v394 = vadd.f32 %v392, %v393
          %v395 = vsel %vm202, %v350, 0.0
          %v396 = vrot.slane %v395, 4
          %v397 = vadd.f32 %v395, %v396
          %v398 = vrot.slane %v397, 2
          %v399 = vadd.f32 %v397, %v398
          %v400 = vrot.slane %v399, 1
          %v401 = vadd.f32 %v399, %v400
          %v402 = vsel %vm202, %v349, 0.0
          %v403 = vrot.slane %v402, 4
          %v404 = vadd.f32 %v402, %v403
          %v405 = vrot.slane %v404, 2
          %v406 = vadd.f32 %v404, %v405
          %v407 = vrot.slane %v406, 1
          %v408 = vadd.f32 %v406, %v407
          %v409 = vsel %vm202, %v351, 0.0
          %v410 = vrot.slane %v409, 4
          %v411 = vadd.f32 %v409, %v410
          %v412 = vrot.slane %v411, 2
          %v413 = vadd.f32 %v411, %v412
          %v414 = vrot.slane %v413, 1
          %v415 = vadd.f32 %v413, %v414
          %v416 = vmul.f32 %v366, %v259
          %v417 = vmul.f32 %v373, %v259
          %v418 = vmul.f32 %v380, %v259
          %v419 = vmul.f32 %v387, %v259
          %v420 = vmul.f32 %v394, %v259
          %v421 = vmul.f32 %v401, %v259
          %v422 = vmul.f32 %v408, %v259
          %v423 = vmul.f32 %v415, %v259
          %v424 = vadd.f32 %v416, 1e-08
          %v425 = vadd.f32 %v417, 1e-08
          %v426 = vadd.f32 %v418, 1e-08
          %v427 = vadd.f32 %v419, 1e-08
          %v428 = vadd.f32 %v420, 1e-08
          %v429 = vadd.f32 %v421, 1e-08
          %v430 = vadd.f32 %v422, 1e-08
          %v431 = vadd.f32 %v423, 1e-08
          %v432 = vrsqrt.pop %v424
          %v433 = vmul.f32 %v424, %v432
          %vm434 = vcmp.eq.f32.partialorder %v424, inf
          %v435 = vsel %vm434, %v424, %v433
          %vm436 = vcmp.eq.f32.partialorder %v424, 0.0
          %v437 = vand.u32 %v424, 2147483648
          %v438 = vsel %vm436, %v437, %v435
          %v439 = vrsqrt.pop %v425
          %v440 = vmul.f32 %v425, %v439
          %vm441 = vcmp.eq.f32.partialorder %v425, inf
          %v442 = vsel %vm441, %v425, %v440
          %vm443 = vcmp.eq.f32.partialorder %v425, 0.0
          %v444 = vand.u32 %v425, 2147483648
          %v445 = vsel %vm443, %v444, %v442
          %v446 = vrsqrt.pop %v426
          %v447 = vmul.f32 %v426, %v446
          %vm448 = vcmp.eq.f32.partialorder %v426, inf
          %v449 = vsel %vm448, %v426, %v447
          %vm450 = vcmp.eq.f32.partialorder %v426, 0.0
          %v451 = vand.u32 %v426, 2147483648
          %v452 = vsel %vm450, %v451, %v449
          %v453 = vrsqrt.pop %v427
          %v454 = vmul.f32 %v427, %v453
          %vm455 = vcmp.eq.f32.partialorder %v427, inf
          %v456 = vsel %vm455, %v427, %v454
          %vm457 = vcmp.eq.f32.partialorder %v427, 0.0
          %v458 = vand.u32 %v427, 2147483648
          %v459 = vsel %vm457, %v458, %v456
          %v460 = vrsqrt.pop %v428
          %v461 = vmul.f32 %v428, %v460
          %vm462 = vcmp.eq.f32.partialorder %v428, inf
          %v463 = vsel %vm462, %v428, %v461
          %vm464 = vcmp.eq.f32.partialorder %v428, 0.0
          %v465 = vand.u32 %v428, 2147483648
          %v466 = vsel %vm464, %v465, %v463
          %v467 = vrsqrt.pop %v429
          %v468 = vmul.f32 %v429, %v467
          %vm469 = vcmp.eq.f32.partialorder %v429, inf
          %v470 = vsel %vm469, %v429, %v468
          %vm471 = vcmp.eq.f32.partialorder %v429, 0.0
          %v472 = vand.u32 %v429, 2147483648
          %v473 = vsel %vm471, %v472, %v470
          %v474 = vrsqrt.pop %v430
          %v475 = vmul.f32 %v430, %v474
          %vm476 = vcmp.eq.f32.partialorder %v430, inf
          %v477 = vsel %vm476, %v430, %v475
          %vm478 = vcmp.eq.f32.partialorder %v430, 0.0
          %v479 = vand.u32 %v430, 2147483648
          %v480 = vsel %vm478, %v479, %v477
          %v481 = vrsqrt.pop %v431
          %v482 = vmul.f32 %v431, %v481
          %vm483 = vcmp.eq.f32.partialorder %v431, inf
          %v484 = vsel %vm483, %v431, %v482
          %vm485 = vcmp.eq.f32.partialorder %v431, 0.0
          %v486 = vand.u32 %v431, 2147483648
          %v487 = vsel %vm485, %v486, %v484
          %v488 = vld [vmem:[#allocation2] sm:$0xff]
          %v497 = vcombine.low %v438, %v445
          %v498 = vcombine.low %v452, %v459
          %v499 = vcombine.low %v466, %v473
          %v500 = vcombine.low %v480, %v487
          %v502 = vunpack.c.l.s4 1966171168
          %v503 = vunpack.c.0.s8 %v502
          %v504 = vlaneseq
          %v505 = vshrl.u32 %v504, 7
          %v506 = vsub.s32 %v503, %v505
          %v507 = vrot.slane %v497, %v506
          %v509 = vunpack.c.l.s4 1966171168
          %v510 = vunpack.c.0.s8 %v509
          %v511 = vlaneseq
          %v512 = vshrl.u32 %v511, 7
          %v513 = vsub.s32 %v510, %v512
          %v514 = vrot.slane %v498, %v513
          %v516 = vunpack.c.l.s4 1966171168
          %v517 = vunpack.c.0.s8 %v516
          %v518 = vlaneseq
          %v519 = vshrl.u32 %v518, 7
          %v520 = vsub.s32 %v517, %v519
          %v521 = vrot.slane %v499, %v520
          %v523 = vunpack.c.l.s4 1966171168
          %v524 = vunpack.c.0.s8 %v523
          %v525 = vlaneseq
          %v526 = vshrl.u32 %v525, 7
          %v527 = vsub.s32 %v524, %v526
          %v528 = vrot.slane %v500, %v527
          %v529 = vcombine.low %v507, %v514
          %v530 = vcombine.low %v521, %v528
          %v532 = vunpack.c.l.s4 1966171168
          %v533 = vunpack.c.0.s8 %v532
          %v534 = vlaneseq
          %v535 = vshrl.u32 %v534, 7
          %v536 = vsub.s32 %v533, %v535
          %v537 = vrot.slane %v529, %v536
          %v539 = vunpack.c.l.s4 1966171168
          %v540 = vunpack.c.0.s8 %v539
          %v541 = vlaneseq
          %v542 = vshrl.u32 %v541, 7
          %v543 = vsub.s32 %v540, %v542
          %v544 = vrot.slane %v530, %v543
          %v545 = vcombine.low %v537, %v544
          %v547 = vadd.f32 %v488, %v545
          %548 = vst [vmem:[#allocation2] sm:$0xff] %v547
          %549 = vst [vmem:[%s138] sm:$0xff] %v156
          %550 = vst [vmem:[%s138 + $0x8] sm:$0xff] %v157
        $region36: #{tpu_custom_call.1} parent=23 // pred_fallthru
          _
        %p551 = scmp.ge.s32.totalorder %s18, 1
        // Predicated region
        $region37: #{tpu_custom_call.1} parent=23 // pred_check
          %p552 = pneg %p551
        $region38: #{tpu_custom_call.1} parent=23 // pred_check_branch
          %554 = sbr.rel (%p552) target = $region40
        $region39: #{tpu_custom_call.1} parent=23 // pred_region
          %v555 = vld [vmem:[#allocation2] sm:$0xff]
          %v557 = vlaneseq
          %v558 = vshrl.u32 %v557, 7
          %v559 = vsub.s32 0, %v558
          %v560 = vrot.slane %v555, %v559
          %v561 = vlaneseq
          %v562 = vshrl.u32 %v561, 7
          %v563 = vsub.s32 1, %v562
          %v564 = vrot.slane %v555, %v563
          %v565 = vlaneseq
          %v566 = vshrl.u32 %v565, 7
          %v567 = vsub.s32 2, %v566
          %v568 = vrot.slane %v555, %v567
          %v569 = vlaneseq
          %v570 = vshrl.u32 %v569, 7
          %v571 = vsub.s32 3, %v570
          %v572 = vrot.slane %v555, %v571
          %v573 = vlaneseq
          %v574 = vshrl.u32 %v573, 7
          %v575 = vsub.s32 4, %v574
          %v576 = vrot.slane %v555, %v575
          %v577 = vlaneseq
          %v578 = vshrl.u32 %v577, 7
          %v579 = vsub.s32 5, %v578
          %v580 = vrot.slane %v555, %v579
          %v581 = vlaneseq
          %v582 = vshrl.u32 %v581, 7
          %v583 = vsub.s32 6, %v582
          %v584 = vrot.slane %v555, %v583
          %v585 = vlaneseq
          %v586 = vshrl.u32 %v585, 7
          %v587 = vsub.s32 7, %v586
          %v588 = vrot.slane %v555, %v587
          %vm597 = vcmask 1040384
          %v598 = vsel %vm597, %v560, 0.0
          %v599 = vsel %vm597, %v564, 0.0
          %v600 = vadd.f32 %v598, %v599
          %v601 = vsel %vm597, %v568, 0.0
          %v602 = vadd.f32 %v600, %v601
          %v603 = vsel %vm597, %v572, 0.0
          %v604 = vadd.f32 %v602, %v603
          %v605 = vsel %vm597, %v576, 0.0
          %v606 = vadd.f32 %v604, %v605
          %v607 = vsel %vm597, %v580, 0.0
          %v608 = vadd.f32 %v606, %v607
          %v609 = vsel %vm597, %v584, 0.0
          %v610 = vadd.f32 %v608, %v609
          %v611 = vsel %vm597, %v588, 0.0
          %v612 = vadd.f32 %v610, %v611
          %613 = vadd.xlane.f32.xlu0 %v612
          %v614 = vpop.xlane.xlu0 %613
          %v615 = vrot.slane %v614, 4
          %v616 = vadd.f32 %v614, %v615
          %v617 = vrot.slane %v616, 2
          %v618 = vadd.f32 %v616, %v617
          %v619 = vrot.slane %v618, 1
          %v620 = vadd.f32 %v618, %v619
          %s621 = vtos %v620
          %v622 = vstv %s621
          %v623 = vmul.f32 %v622, 0.0009765625
          %624 = vst [vmem:[%s138] sm:$0xff] %v623
          %625 = vst [vmem:[%s138 + $0x8] sm:$0xff] %v623
        $region40: #{tpu_custom_call.1} parent=23 // pred_fallthru
          _
        %s626 = sand.u32 %s56, 1
        %s627 = scalar_lea.sflag [#allocation5], %s626
        %s628 = sand.u32 %s56, 1
        %s629 = smul.addr %s628, 16
        %s630 = scalar_lea.vmem [#allocation6], %s629
        // Predicated region
        $region41: #{tpu_custom_call.1} parent=23 // pred_check
          %p631 = pneg %p66
        $region42: #{tpu_custom_call.1} parent=23 // pred_check_branch
          %633 = sbr.rel (%p631) target = $region44
        $region43: #{tpu_custom_call.1} parent=23 // pred_region
          %s634 = smul.u32 8, %s18
          %s635 = ssub.s32 10, %s634
          %p636 = scmp.lt.s32.totalorder %s635, 8
          %s637 = scalar_select %p636, %s635, 8
          %s638 = smul.u32 32, %s637
          %s640 = ssub.s32 256, %s638
          %641 = vsyncadd %s627, %s640
          %p642 = scmp.ne.s32.totalorder 0, %s638
          %s643 = smul.addr %s634, 32
          %s644 = scalar_lea.hbm %s1, %s643
          %s645 = smul.u32 %s637, 2
          %s646 = sshll.u32 %s645, 4
          %s647 = sshll.u32 %s630, 4
          %s648 = int_to_ptr.vmem [resolvable:$true] %s647
          %650 = dma.vmem_to_hbm [thread:$0]  (%p642), %s648, %s646, %s644, %s627
        $region44: #{tpu_custom_call.1} parent=23 // pred_fallthru
          _
      $region24: #{tpu_custom_call.1} parent=5 // pred_fallthru
        _
      %p651 = scmp.le.s32.totalorder 2, %s13
      // Predicated region
      $region45: #{tpu_custom_call.1} parent=5 // pred_check
        %p652 = pneg %p651
      $region46: #{tpu_custom_call.1} parent=5 // pred_check_branch
        %654 = sbr.rel (%p652) target = $region48
      $region47: #{tpu_custom_call.1} parent=5 // pred_region
        %s655 = ssub.s32 %s13, 2
        // Predicated region
        $region49: #{tpu_custom_call.1} parent=47 // pred_check
          %p656 = pneg %p72
        $region50: #{tpu_custom_call.1} parent=47 // pred_check_branch
          %658 = sbr.rel (%p656) target = $region52
        $region51: #{tpu_custom_call.1} parent=47 // pred_region
          %s659 = sand.u32 %s57, 1
          %s660 = scalar_lea.sflag [#allocation5], %s659
          %s661 = sand.u32 %s57, 1
          %s662 = smul.addr %s661, 16
          %s663 = scalar_lea.vmem [#allocation6], %s662
          %664 = dma.done %s660, 256
        $region52: #{tpu_custom_call.1} parent=47 // pred_fallthru
          _
      $region48: #{tpu_custom_call.1} parent=5 // pred_fallthru
        _
    $region6: #{tpu_custom_call.1} parent=1 // loop_footer
      %s17 = sadd.s32 1, %s13
    $region7: #{tpu_custom_call.1} parent=1 // loop_footer_branch
      %12 = sbr.rel target = $region3
    $region8: #{tpu_custom_call.1} parent=1 // loop_exit
      _
    %665 = vsyncpa [#allocation4], 1
    %s666 = scalar_lea.sflag [#allocation4], 1
    %667 = vsyncpa %s666, 1
    %668 = vsyncpa [#allocation5], 1
    %s669 = scalar_lea.sflag [#allocation5], 1
    %670 = vsyncpa %s669, 1

</llo_original>
